<compile_context>
chip_gen: v7x
topology: tpu7x:2x2x1
jax: 0.10.0
libtpu: 0.0.40
codegen_flags: <defaults>
</compile_context>

<pallas_src>
import functools
import math

import jax
import jax.numpy as jnp
from jax import lax
from jax.experimental import pallas as pl
from jax.experimental.pallas import tpu as pltpu


def _layernorm(x, gamma, beta, eps=1e-5):
    # Matches LayerNormalization.forward (biased variance, eps=1e-5), f32 math.
    mean = jnp.mean(x, axis=-1, keepdims=True)
    var = jnp.mean(jnp.square(x - mean), axis=-1, keepdims=True)
    y = (x - mean) * lax.rsqrt(var + eps)
    return gamma * y + beta


# --------------------------------------------------------------------------
# Kernel 1: K/V projection (once per token) -> head-major bf16 slabs.
# --------------------------------------------------------------------------
def kv_proj_kernel(x_ref, wk_ref, bk_ref, wv_ref, bv_ref, k_ref, v_ref,
                   *, num_heads, head_dim):
    H, hd = num_heads, head_dim
    x_b = x_ref[0].astype(jnp.bfloat16)                       # (TS, D)
    TS = x_b.shape[0]

    k2 = jnp.dot(x_b, wk_ref[...],
                 preferred_element_type=jnp.float32) + bk_ref[...]   # (TS, D) f32
    v2 = jnp.dot(x_b, wv_ref[...],
                 preferred_element_type=jnp.float32) + bv_ref[...]

    # Single bf16 cast after the bias add, then head-major (H, TS, hd) layout.
    k3 = jnp.transpose(k2.astype(jnp.bfloat16).reshape(TS, H, hd), (1, 0, 2))
    v3 = jnp.transpose(v2.astype(jnp.bfloat16).reshape(TS, H, hd), (1, 0, 2))
    k_ref[0] = k3
    v_ref[0] = v3


# --------------------------------------------------------------------------
# Kernel 2: encoder block (Q proj + flash attention + out proj + LN + FFN + LN)
# --------------------------------------------------------------------------
def encoder_block_kernel(
    xq_ref, k_ref, v_ref,
    wq_ref, bq_ref, wo_ref, bo_ref,
    g1_ref, be1_ref,
    w1_ref, b1_ref, w2_ref, b2_ref,
    g2_ref, be2_ref,
    o_ref,
    *, num_heads, head_dim, kv_chunk,
):
    H, hd = num_heads, head_dim
    D = H * hd
    x_q = xq_ref[0]                                 # (TQ, D) f32
    TQ = x_q.shape[0]
    S = k_ref.shape[2]
    n_chunks = S // kv_chunk                        # static Python int

    # ---- Q projection: one fused lane-dense matmul, scale folded into Q ----
    xq_b = x_q.astype(jnp.bfloat16)
    scale = 1.0 / math.sqrt(hd)
    q2 = (jnp.dot(xq_b, wq_ref[...],
                  preferred_element_type=jnp.float32) + bq_ref[...]) * scale
    q3 = jnp.transpose(q2.astype(jnp.bfloat16).reshape(TQ, H, hd),
                       (1, 0, 2))                   # (H, TQ, hd) bf16

    # ---- flash-style online softmax over KV chunks (bounded working set) ----
    m0 = jnp.full((H, TQ, 1), -jnp.inf, jnp.float32)
    l0 = jnp.zeros((H, TQ, 1), jnp.float32)
    a0 = jnp.zeros((H, TQ, hd), jnp.float32)

    def body(c, carry):
        m, l, acc = carry
        start = pl.multiple_of(c * kv_chunk, kv_chunk)
        kc = k_ref[0, :, pl.ds(start, kv_chunk), :]          # (H, TK, hd) bf16
        vc = v_ref[0, :, pl.ds(start, kv_chunk), :]
        s = jnp.einsum("hqe,hke->hqk", q3, kc,
                       preferred_element_type=jnp.float32)   # (H, TQ, TK) f32
        m_new = jnp.maximum(m, s.max(axis=-1, keepdims=True))
        alpha = jnp.exp(m - m_new)
        p = jnp.exp(s - m_new)
        l_new = alpha * l + p.sum(axis=-1, keepdims=True)
        acc_new = alpha * acc + jnp.einsum(
            "hqk,hke->hqe", p.astype(jnp.bfloat16), vc,
            preferred_element_type=jnp.float32)
        return (m_new, l_new, acc_new)

    m, l, acc = lax.fori_loop(0, n_chunks, body, (m0, l0, a0))
    vals = acc * pl.reciprocal(l, approx=True)               # (H, TQ, hd) f32

    # ---- output projection: single (TQ, D) x (D, D) matmul -------------------
    vals2 = jnp.transpose(vals.astype(jnp.bfloat16), (1, 0, 2)).reshape(TQ, D)
    attn_out = jnp.dot(vals2, wo_ref[...],
                       preferred_element_type=jnp.float32) + bo_ref[...]

    # ---- residual + norm1 (dropout1 = identity, eval mode) -------------------
    h1 = _layernorm(x_q + attn_out, g1_ref[...], be1_ref[...])

    # ---- PositionWiseFeedForward (dropout = identity) ------------------------
    f = jnp.dot(h1.astype(jnp.bfloat16), w1_ref[...],
                preferred_element_type=jnp.float32) + b1_ref[...]
    f = jnp.maximum(f, 0.0)                                    # ReLU
    f = jnp.dot(f.astype(jnp.bfloat16), w2_ref[...],
                preferred_element_type=jnp.float32) + b2_ref[...]

    # ---- residual + norm2 -----------------------------------------------------
    out = _layernorm(h1 + f, g2_ref[...], be2_ref[...])
    o_ref[0] = out.astype(o_ref.dtype)


def _divisor_tile(total, target):
    t = max(1, min(total, target))
    while total % t:
        t -= 1
    return t


def _vmem_ceiling():
    """Per-generation VMEM budget (leave ~20% headroom for compiler scratch)."""
    try:
        cap = int(pltpu.get_tpu_info().vmem_capacity_bytes)
    except Exception:  # pragma: no cover - conservative fallback
        cap = 128 * 2**20
    return int(cap * 0.80)


def encoder_block(x, params, *, num_heads, q_tile=256, kv_tile=512):
    """x: (B, S, D) float32.  params: dict of weights (see init_params)."""
    B, S, D = x.shape
    H = num_heads
    assert D % H == 0
    hd = D // H
    F = params["w1"].shape[1]

    TQ = _divisor_tile(S, q_tile)     # query / FFN row tile
    TK = _divisor_tile(S, kv_tile)    # KV chunk for the online softmax

    # ---- wrapper-side (free, XLA) layout transform + bf16 weight cast --------
    # PyTorch's qkv reshape interleaves [q_h | k_h | v_h] per head along the
    # 3*D columns; split into head-major wide (D, D) slabs (col = h*hd + e).
    w4 = params["wqkv"].reshape(D, H, 3, hd)
    wq = w4[:, :, 0, :].reshape(D, D).astype(jnp.bfloat16)
    wk = w4[:, :, 1, :].reshape(D, D).astype(jnp.bfloat16)
    wv = w4[:, :, 2, :].reshape(D, D).astype(jnp.bfloat16)
    b4 = params["bqkv"].reshape(H, 3, hd)
    bq = b4[:, 0, :].reshape(1, D)
    bk = b4[:, 1, :].reshape(1, D)
    bv = b4[:, 2, :].reshape(1, D)
    # wo rows are already head-major (h*hd + e) via values.reshape(B,S,D).
    wo = params["wo"].astype(jnp.bfloat16)
    w1 = params["w1"].astype(jnp.bfloat16)
    w2 = params["w2"].astype(jnp.bfloat16)

    vmem = pl.BlockSpec(memory_space=pltpu.MemorySpace.VMEM)
    vmem_cap = _vmem_ceiling()

    # ======================== kernel 1: K/V projection ========================
    kv_kernel = functools.partial(kv_proj_kernel, num_heads=H, head_dim=hd)
    kv_weight_bytes = 2 * (2 * D * D) + 4 * 2 * D
    kv_req = (kv_weight_bytes
              + 2 * TQ * D * 4            # x block, double-buffered
              + 2 * 2 * TQ * D * 2        # K/V out blocks, double-buffered
              + 4 * TQ * D * 4)           # in-kernel f32/bf16 intermediates
    kv_vmem = int(min(max(2 * kv_req, 16 * 2**20), vmem_cap))
    kv_cost = pl.CostEstimate(
        flops=int(2 * B * S * 2 * D * D),
        transcendentals=0,
        bytes_accessed=int(B * S * D * 4 + 2 * B * S * D * 2 + kv_weight_bytes),
    )
    k_hm, v_hm = pl.pallas_call(
        kv_kernel,
        out_shape=(jax.ShapeDtypeStruct((B, H, S, hd), jnp.bfloat16),
                   jax.ShapeDtypeStruct((B, H, S, hd), jnp.bfloat16)),
        grid_spec=pltpu.PrefetchScalarGridSpec(
            num_scalar_prefetch=0,
            grid=(B, S // TQ),
            in_specs=[pl.BlockSpec((1, TQ, D), lambda b, si: (b, si, 0))]
            + [vmem] * 4,
            out_specs=(pl.BlockSpec((1, H, TQ, hd), lambda b, si: (b, 0, si, 0)),
                       pl.BlockSpec((1, H, TQ, hd), lambda b, si: (b, 0, si, 0))),
        ),
        compiler_params=pltpu.CompilerParams(
            dimension_semantics=("parallel", "parallel"),
            vmem_limit_bytes=kv_vmem,
        ),
        cost_estimate=kv_cost,
    )(x, wk, bk, wv, bv)

    # ========================= kernel 2: encoder block ========================
    kernel = functools.partial(encoder_block_kernel, num_heads=H, head_dim=hd,
                               kv_chunk=TK)

    weight_bytes = 2 * (2 * D * D + 2 * D * F) + 4 * (7 * D + F)
    block_bytes = (2 * TQ * D * 4            # x query block (double-buffered)
                   + 2 * TQ * D * 4          # output block (double-buffered)
                   + 2 * 2 * (2 * S * D))    # K + V bf16 blocks (double-buffered)
    act_bytes = 4 * (2 * H * TQ * TK         # per-chunk scores + probabilities
                     + 2 * H * TQ * hd       # acc + q slab
                     + 4 * TQ * max(D, F))   # attn_out / h1 / ffn intermediates
    main_req = weight_bytes + block_bytes + act_bytes
    main_vmem = int(min(max(2 * main_req, 32 * 2**20), vmem_cap))

    flops = 2 * B * S * (2 * D * D           # Q proj + output proj
                         + 2 * S * D         # scores + attention*V
                         + 2 * D * F)        # FFN
    cost = pl.CostEstimate(
        flops=int(flops),
        transcendentals=int(B * H * S * S),
        bytes_accessed=int(2 * B * S * D * 4 + 2 * B * S * D * 2 + weight_bytes),
    )

    in_specs = [
        pl.BlockSpec((1, TQ, D), lambda b, qi: (b, qi, 0)),      # x query tile
        pl.BlockSpec((1, H, S, hd), lambda b, qi: (b, 0, 0, 0)),  # K (per batch)
        pl.BlockSpec((1, H, S, hd), lambda b, qi: (b, 0, 0, 0)),  # V (per batch)
    ] + [vmem] * 12

    return pl.pallas_call(
        kernel,
        out_shape=jax.ShapeDtypeStruct((B, S, D), x.dtype),
        grid_spec=pltpu.PrefetchScalarGridSpec(
            num_scalar_prefetch=0,
            grid=(B, S // TQ),
            in_specs=in_specs,
            out_specs=pl.BlockSpec((1, TQ, D), lambda b, qi: (b, qi, 0)),
        ),
        compiler_params=pltpu.CompilerParams(
            dimension_semantics=("parallel", "parallel"),
            vmem_limit_bytes=main_vmem,
        ),
        cost_estimate=cost,
    )(x, k_hm, v_hm, wq, bq, wo, params["bo"],
      params["gamma1"], params["beta1"],
      w1, params["b1"], w2, params["b2"],
      params["gamma2"], params["beta2"])


# TODO(synk): training-mode dropout (RNG masks) not implemented; forward uses
# eval-mode identity semantics for dropout/dropout1/dropout2.


def encoder_block_ref(x, params, *, num_heads):
    """Pure-JAX f32 reference mirroring the PyTorch forward (eval mode)."""
    B, S, D = x.shape
    hd = D // num_heads
    qkv = x @ params["wqkv"] + params["bqkv"][0]              # (B,S,3D)
    qkv = qkv.reshape(B, S, num_heads, 3 * hd).transpose(0, 2, 1, 3)
    q, k, v = jnp.split(qkv, 3, axis=-1)
    s = jnp.einsum("bhqd,bhkd->bhqk", q, k) / math.sqrt(hd)
    s = jnp.clip(s, -1e9, 1e9)
    a = jax.nn.softmax(s, axis=-1)
    vals = jnp.einsum("bhqk,bhkd->bhqd", a, v)
    vals = vals.transpose(0, 2, 1, 3).reshape(B, S, D)
    attn_out = vals @ params["wo"] + params["bo"][0]

    def ln(t, g, b):
        m = t.mean(-1, keepdims=True)
        var = ((t - m) ** 2).mean(-1, keepdims=True)
        return g[0] * (t - m) / jnp.sqrt(var + 1e-5) + b[0]

    h1 = ln(x + attn_out, params["gamma1"], params["beta1"])
    f = jnp.maximum(h1 @ params["w1"] + params["b1"][0], 0.0)
    f = f @ params["w2"] + params["b2"][0]
    return ln(h1 + f, params["gamma2"], params["beta2"])


def init_params(key, d_model, num_heads, hidden):
    ks = jax.random.split(key, 6)
    sc = 0.1
    return {
        "wqkv": sc * jax.random.normal(ks[0], (d_model, 3 * d_model), jnp.float32),
        "bqkv": sc * jax.random.normal(ks[1], (1, 3 * d_model), jnp.float32),
        "wo":   sc * jax.random.normal(ks[2], (d_model, d_model), jnp.float32),
        "bo":   sc * jax.random.normal(ks[3], (1, d_model), jnp.float32),
        "gamma1": jnp.ones((1, d_model), jnp.float32),
        "beta1":  jnp.zeros((1, d_model), jnp.float32),
        "w1":   sc * jax.random.normal(ks[4], (d_model, hidden), jnp.float32),
        "b1":   jnp.zeros((1, hidden), jnp.float32),
        "w2":   sc * jax.random.normal(ks[5], (hidden, d_model), jnp.float32),
        "b2":   jnp.zeros((1, d_model), jnp.float32),
        "gamma2": jnp.ones((1, d_model), jnp.float32),
        "beta2":  jnp.zeros((1, d_model), jnp.float32),
    }


if __name__ == "__main__":
    B, S, D = 2, 16, 32
    NUM_HEADS, HIDDEN = 4, 64

    key = jax.random.PRNGKey(0)
    kx, kp = jax.random.split(key)
    x = jax.random.normal(kx, (B, S, D), jnp.float32)
    params = init_params(kp, D, NUM_HEADS, HIDDEN)

    # q_tile=8 and kv_tile=8 exercise both the query-tiling path (grid (2, 2))
    # and the KV-chunked online-softmax path (2 chunks per tile).
    out = encoder_block(x, params, num_heads=NUM_HEADS, q_tile=8, kv_tile=8)
    out = jax.block_until_ready(out)

    ref = encoder_block_ref(x, params, num_heads=NUM_HEADS)
    assert out.shape == (B, S, D)
    max_err = float(jnp.max(jnp.abs(out - ref)))
    # bf16 MXU inputs (f32 accumulation) => loosen tolerance vs the f32 reference.
    assert jnp.allclose(out, ref, rtol=2e-2, atol=2e-2), f"mismatch: {max_err}"
    print("KERNEL_OK")
</pallas_src>

<mosaic_0001>
module attributes {stable_mosaic.version = 11 : i64} {
  func.func @kv_proj_kernel(%arg0: i32, %arg1: i32, %arg2: memref<1x8x32xf32, #tpu.memory_space<vmem>>, %arg3: memref<32x32xbf16, #tpu.memory_space<vmem>>, %arg4: memref<1x32xf32, #tpu.memory_space<vmem>>, %arg5: memref<32x32xbf16, #tpu.memory_space<vmem>>, %arg6: memref<1x32xf32, #tpu.memory_space<vmem>>, %arg7: memref<1x4x8x8xbf16, #tpu.memory_space<vmem>>, %arg8: memref<1x4x8x8xbf16, #tpu.memory_space<vmem>>) attributes {dimension_semantics = [#tpu.dimension_semantics<parallel>, #tpu.dimension_semantics<parallel>], iteration_bounds = array<i64: 2, 2>, scalar_prefetch = 0 : i64, scratch_operands = 0 : i64, tpu.core_type = #tpu.core_type<tc>, window_params = [{transform_indices = @transform_0, window_bounds = array<i64: 1, 8, 32>}, {pipeline_mode = #tpu.pipeline_mode<synchronous>, transform_indices = @transform_1, window_bounds = array<i64: 32, 32>}, {pipeline_mode = #tpu.pipeline_mode<synchronous>, transform_indices = @transform_2, window_bounds = array<i64: 1, 32>}, {pipeline_mode = #tpu.pipeline_mode<synchronous>, transform_indices = @transform_3, window_bounds = array<i64: 32, 32>}, {pipeline_mode = #tpu.pipeline_mode<synchronous>, transform_indices = @transform_4, window_bounds = array<i64: 1, 32>}, {transform_indices = @transform_5, window_bounds = array<i64: 1, 4, 8, 8>}, {transform_indices = @transform_6, window_bounds = array<i64: 1, 4, 8, 8>}]} {
    %c0 = arith.constant 0 : index
    %c0_0 = arith.constant 0 : index
    %c0_1 = arith.constant 0 : index
    %0 = vector.load %arg2[%c0, %c0_0, %c0_1] : memref<1x8x32xf32, #tpu.memory_space<vmem>>, vector<1x8x32xf32>
    %1 = vector.shape_cast %0 : vector<1x8x32xf32> to vector<8x32xf32>
    %2 = arith.truncf %1 : vector<8x32xf32> to vector<8x32xbf16>
    %c0_2 = arith.constant 0 : index
    %c0_3 = arith.constant 0 : index
    %3 = vector.load %arg3[%c0_2, %c0_3] : memref<32x32xbf16, #tpu.memory_space<vmem>>, vector<32x32xbf16>
    %cst = arith.constant dense<0.000000e+00> : vector<8x32xf32>
    %4 = tpu.matmul %2, %3, %cst {dimension_numbers = #tpu.dot_dimension_numbers<[1], [0], [0], [1], [0, 0, 1, 1], [], []>} : vector<8x32xbf16>, vector<32x32xbf16>, vector<8x32xf32> -> vector<8x32xf32>
    %c0_4 = arith.constant 0 : index
    %c0_5 = arith.constant 0 : index
    %5 = vector.load %arg4[%c0_4, %c0_5] : memref<1x32xf32, #tpu.memory_space<vmem>>, vector<1x32xf32>
    %6 = vector.broadcast %5 : vector<1x32xf32> to vector<8x32xf32>
    %7 = arith.addf %4, %6 : vector<8x32xf32>
    %c0_6 = arith.constant 0 : index
    %c0_7 = arith.constant 0 : index
    %8 = vector.load %arg5[%c0_6, %c0_7] : memref<32x32xbf16, #tpu.memory_space<vmem>>, vector<32x32xbf16>
    %cst_8 = arith.constant dense<0.000000e+00> : vector<8x32xf32>
    %9 = tpu.matmul %2, %8, %cst_8 {dimension_numbers = #tpu.dot_dimension_numbers<[1], [0], [0], [1], [0, 0, 1, 1], [], []>} : vector<8x32xbf16>, vector<32x32xbf16>, vector<8x32xf32> -> vector<8x32xf32>
    %c0_9 = arith.constant 0 : index
    %c0_10 = arith.constant 0 : index
    %10 = vector.load %arg6[%c0_9, %c0_10] : memref<1x32xf32, #tpu.memory_space<vmem>>, vector<1x32xf32>
    %11 = vector.broadcast %10 : vector<1x32xf32> to vector<8x32xf32>
    %12 = arith.addf %9, %11 : vector<8x32xf32>
    %13 = arith.truncf %7 : vector<8x32xf32> to vector<8x32xbf16>
    %14 = vector.shape_cast %13 : vector<8x32xbf16> to vector<8x4x8xbf16>
    %15 = tpu.transpose %14, [1, 0, 2] : vector<8x4x8xbf16> -> vector<4x8x8xbf16>
    %16 = arith.truncf %12 : vector<8x32xf32> to vector<8x32xbf16>
    %17 = vector.shape_cast %16 : vector<8x32xbf16> to vector<8x4x8xbf16>
    %18 = tpu.transpose %17, [1, 0, 2] : vector<8x4x8xbf16> -> vector<4x8x8xbf16>
    %c0_11 = arith.constant 0 : index
    %c0_12 = arith.constant 0 : index
    %c0_13 = arith.constant 0 : index
    %c0_14 = arith.constant 0 : index
    %19 = vector.load %arg7[%c0_11, %c0_12, %c0_13, %c0_14] : memref<1x4x8x8xbf16, #tpu.memory_space<vmem>>, vector<1x4x8x8xbf16>
    %20 = vector.shape_cast %19 : vector<1x4x8x8xbf16> to vector<4x8x8xbf16>
    %21 = vector.shape_cast %15 : vector<4x8x8xbf16> to vector<1x4x8x8xbf16>
    tpu.vector_store %arg7[%c0_11, %c0_12, %c0_13, %c0_14], %21 {strides = array<i32>} : memref<1x4x8x8xbf16, #tpu.memory_space<vmem>>, vector<1x4x8x8xbf16>,
    %c0_15 = arith.constant 0 : index
    %c0_16 = arith.constant 0 : index
    %c0_17 = arith.constant 0 : index
    %c0_18 = arith.constant 0 : index
    %22 = vector.load %arg8[%c0_15, %c0_16, %c0_17, %c0_18] : memref<1x4x8x8xbf16, #tpu.memory_space<vmem>>, vector<1x4x8x8xbf16>
    %23 = vector.shape_cast %22 : vector<1x4x8x8xbf16> to vector<4x8x8xbf16>
    %24 = vector.shape_cast %18 : vector<4x8x8xbf16> to vector<1x4x8x8xbf16>
    tpu.vector_store %arg8[%c0_15, %c0_16, %c0_17, %c0_18], %24 {strides = array<i32>} : memref<1x4x8x8xbf16, #tpu.memory_space<vmem>>, vector<1x4x8x8xbf16>,
    return
  }
  func.func @transform_0(%arg0: i32, %arg1: i32) -> (i32, i32, i32) {
    %c0_i32 = arith.constant 0 : i32
    %c0_i32_0 = arith.constant 0 : i32
    return %arg0, %arg1, %c0_i32 : i32, i32, i32
  }
  func.func @transform_1(%arg0: i32, %arg1: i32) -> (i32, i32) {
    %c0_i32 = arith.constant 0 : i32
    %c0_i32_0 = arith.constant 0 : i32
    %c0_i32_1 = arith.constant 0 : i32
    return %c0_i32, %c0_i32_0 : i32, i32
  }
  func.func @transform_2(%arg0: i32, %arg1: i32) -> (i32, i32) {
    %c0_i32 = arith.constant 0 : i32
    %c0_i32_0 = arith.constant 0 : i32
    %c0_i32_1 = arith.constant 0 : i32
    return %c0_i32, %c0_i32_0 : i32, i32
  }
  func.func @transform_3(%arg0: i32, %arg1: i32) -> (i32, i32) {
    %c0_i32 = arith.constant 0 : i32
    %c0_i32_0 = arith.constant 0 : i32
    %c0_i32_1 = arith.constant 0 : i32
    return %c0_i32, %c0_i32_0 : i32, i32
  }
  func.func @transform_4(%arg0: i32, %arg1: i32) -> (i32, i32) {
    %c0_i32 = arith.constant 0 : i32
    %c0_i32_0 = arith.constant 0 : i32
    %c0_i32_1 = arith.constant 0 : i32
    return %c0_i32, %c0_i32_0 : i32, i32
  }
  func.func @transform_5(%arg0: i32, %arg1: i32) -> (i32, i32, i32, i32) {
    %c0_i32 = arith.constant 0 : i32
    %c0_i32_0 = arith.constant 0 : i32
    %c0_i32_1 = arith.constant 0 : i32
    return %arg0, %c0_i32, %arg1, %c0_i32_0 : i32, i32, i32, i32
  }
  func.func @transform_6(%arg0: i32, %arg1: i32) -> (i32, i32, i32, i32) {
    %c0_i32 = arith.constant 0 : i32
    %c0_i32_0 = arith.constant 0 : i32
    %c0_i32_1 = arith.constant 0 : i32
    return %arg0, %c0_i32, %arg1, %c0_i32_0 : i32, i32, i32, i32
  }
}

</mosaic_0001>

<llo_original>
// kernel: tpu_custom_call.1
$region0: #{tpu_custom_call.1}
  #allocation0 [shape = 'u32[]', space=smem, size = 0x4, offset = 0x4, fixed_abs, tag = 'smem constant byte address 0x4 - core index']
  #allocation1 [shape = 'u32[144,128]{1,0:T(1,128)}', space=vmem, size = 0x12000, scoped, tag = 'internal scratch']
  %s0 = inlined_call_operand.hbm [shape: f32[2,16,32], index: 0, kind: input, shape index: {}]
  %s1 = inlined_call_operand.hbm [shape: bf16[32,32], index: 1, kind: input, shape index: {}]
  %s2 = inlined_call_operand.vmem [shape: f32[1,32], index: 2, kind: input, shape index: {}]
  %s3 = inlined_call_operand.hbm [shape: bf16[32,32], index: 3, kind: input, shape index: {}]
  %s4 = inlined_call_operand.vmem [shape: f32[1,32], index: 4, kind: input, shape index: {}]
  %s5 = inlined_call_operand.vmem [shape: bf16[2,4,16,8], index: 5, kind: output, shape index: {0}]
  %s6 = inlined_call_operand.vmem [shape: bf16[2,4,16,8], index: 6, kind: output, shape index: {1}]
  %7 = xla_tuple %s5, %s6
  %s8 = sld [smem:[#allocation0]]
  $region147: #{tpu_custom_call.1} parent=0
    _
  %s10 = ssub.s32 1, %s8
  %s11 = scalar_select 0, %s10, %s8
  $region1: #{tpu_custom_call.1} parent=0
    #allocation2 [shape = 'u8[8192]{0}', space=vmem, size = 0x2000, scoped, tag = 'input window, operand 0']
    #allocation3 [shape = 's32[2]{0}', space=sflag, size = 0x8, scoped, tag = 'scoped memory for tpu_custom_call.1']
    #allocation4 [shape = 'u8[8192]{0}', space=vmem, size = 0x2000, scoped, tag = 'input window, operand 1, single buffered']
    #allocation5 [shape = 's32[1]{0}', space=sflag, size = 0x4, scoped, tag = 'scoped memory for tpu_custom_call.1']
    #allocation6 [shape = 'u8[8192]{0}', space=vmem, size = 0x2000, scoped, tag = 'input window, operand 3, single buffered']
    #allocation7 [shape = 'u8[16384]{0}', space=vmem, size = 0x4000, scoped, tag = 'output window, operand 0']
    #allocation8 [shape = 'u8[16384]{0}', space=vmem, size = 0x4000, scoped, tag = 'output window, operand 1']
    %12 = vsyncpa [#allocation3], 0
    %s13 = scalar_lea.sflag [#allocation3], 1
    %14 = vsyncpa %s13, 0
    %15 = vsyncpa [#allocation5], 0
    loop: start=0, step=1, limit=6
    $region2: #{tpu_custom_call.1} parent=1 // loop_pre_header
      _
    $region3: #{tpu_custom_call.1} parent=1 // loop_header
      %s17 = sphi 0, %s21
      %p18 = scmp.ge.s32.totalorder %s17, 6
      %s24 = sphi 0, %s36
      %s25 = sphi 0, %s32
      %s26 = sphi 0, %s24
      %s27 = sphi 0, %s25
      %s28 = sphi 0, %s26
      %s29 = sphi 0, %s27
      %s41 = sphi 0, %s43
      %s44 = sphi 0, %s41
      %s45 = sphi 0, %s44
      %s61 = sphi 0, %s45
      %s65 = sphi 0, %s65
      %s67 = sphi 0, %s65
      %s68 = sphi 0, %s67
      %s82 = sphi 0, %s68
      %s86 = sphi 0, %s86
      %s88 = sphi 0, %s86
      %s89 = sphi 0, %s88
      %s103 = sphi 0, %s89
      %s107 = sphi 0, %s107
      %s109 = sphi 0, %s107
      %s110 = sphi 0, %s109
      %s124 = sphi 0, %s110
      %s128 = sphi 0, %s128
      %s130 = sphi 0, %s128
      %s131 = sphi 0, %s130
      %s145 = sphi 0, %s131
      %s153 = sphi 0, %s155
      %s156 = sphi 0, %s153
      %s157 = sphi 0, %s156
      %s173 = sphi 0, %s157
      %s181 = sphi 0, %s183
      %s184 = sphi 0, %s181
      %s185 = sphi 0, %s184
      %s201 = sphi 0, %s185
    $region4: #{tpu_custom_call.1} parent=1 // loop_header_branch
      %20 = sbr.rel (%p18) target = $region8
    $region5: #{tpu_custom_call.1} parent=1 // loop_body
      %s22 = ssub.s32 %s17, 1
      %s23 = ssub.s32 %s17, 2
      %s30 = sadd.s32 1, %s25
      %p31 = scmp.ge.s32.totalorder %s30, 2
      %s32 = scalar_select %p31, 0, %s30
      %s33 = sadd.s32 1, %s24
      %s34 = scalar_select %p31, %s33, %s24
      %p35 = scmp.ge.s32.totalorder %s34, 2
      %s36 = scalar_select %p35, 0, %s34
      %s37 = ssub.s32 %s24, %s36
      %s38 = ssub.s32 %s25, %s32
      %s39 = sor.u32 %s37, %s38
      %p40 = scmp.eq.s32.totalorder %s39, 0
      %s42 = sadd.s32 %s41, 1
      %s43 = scalar_select %p40, %s41, %s42
      %p46 = pneg %p40
      %p47 = scmp.eq.s32.totalorder %s17, 3
      %p48 = por %p46, %p47
      %p49 = scmp.ne.s32.totalorder %s41, %s44
      %p50 = scmp.eq.s32.totalorder %s17, 0
      %p51 = por %p49, %p50
      %p52 = scmp.ne.s32.totalorder %s41, %s44
      %p53 = scmp.eq.s32.totalorder %s22, 3
      %p54 = por %p52, %p53
      %p55 = scmp.ne.s32.totalorder %s44, %s45
      %p56 = scmp.eq.s32.totalorder %s22, 0
      %p57 = por %p55, %p56
      %p58 = scmp.ne.s32.totalorder %s44, %s45
      %p59 = scmp.eq.s32.totalorder %s23, 3
      %p60 = por %p58, %p59
      %p62 = scmp.ne.s32.totalorder %s45, %s61
      %p63 = scmp.eq.s32.totalorder %s23, 0
      %p64 = por %p62, %p63
      %s66 = sadd.s32 %s65, 1
      %p69 = scmp.eq.s32.totalorder %s17, 3
      %p70 = scmp.ne.s32.totalorder %s65, %s67
      %p71 = scmp.eq.s32.totalorder %s17, 0
      %p72 = por %p70, %p71
      %p73 = scmp.ne.s32.totalorder %s65, %s67
      %p74 = scmp.eq.s32.totalorder %s22, 3
      %p75 = por %p73, %p74
      %p76 = scmp.ne.s32.totalorder %s67, %s68
      %p77 = scmp.eq.s32.totalorder %s22, 0
      %p78 = por %p76, %p77
      %p79 = scmp.ne.s32.totalorder %s67, %s68
      %p80 = scmp.eq.s32.totalorder %s23, 3
      %p81 = por %p79, %p80
      %p83 = scmp.ne.s32.totalorder %s68, %s82
      %p84 = scmp.eq.s32.totalorder %s23, 0
      %p85 = por %p83, %p84
      %s87 = sadd.s32 %s86, 1
      %p90 = scmp.eq.s32.totalorder %s17, 3
      %p91 = scmp.ne.s32.totalorder %s86, %s88
      %p92 = scmp.eq.s32.totalorder %s17, 0
      %p93 = por %p91, %p92
      %p94 = scmp.ne.s32.totalorder %s86, %s88
      %p95 = scmp.eq.s32.totalorder %s22, 3
      %p96 = por %p94, %p95
      %p97 = scmp.ne.s32.totalorder %s88, %s89
      %p98 = scmp.eq.s32.totalorder %s22, 0
      %p99 = por %p97, %p98
      %p100 = scmp.ne.s32.totalorder %s88, %s89
      %p101 = scmp.eq.s32.totalorder %s23, 3
      %p102 = por %p100, %p101
      %p104 = scmp.ne.s32.totalorder %s89, %s103
      %p105 = scmp.eq.s32.totalorder %s23, 0
      %p106 = por %p104, %p105
      %s108 = sadd.s32 %s107, 1
      %p111 = scmp.eq.s32.totalorder %s17, 3
      %p112 = scmp.ne.s32.totalorder %s107, %s109
      %p113 = scmp.eq.s32.totalorder %s17, 0
      %p114 = por %p112, %p113
      %p115 = scmp.ne.s32.totalorder %s107, %s109
      %p116 = scmp.eq.s32.totalorder %s22, 3
      %p117 = por %p115, %p116
      %p118 = scmp.ne.s32.totalorder %s109, %s110
      %p119 = scmp.eq.s32.totalorder %s22, 0
      %p120 = por %p118, %p119
      %p121 = scmp.ne.s32.totalorder %s109, %s110
      %p122 = scmp.eq.s32.totalorder %s23, 3
      %p123 = por %p121, %p122
      %p125 = scmp.ne.s32.totalorder %s110, %s124
      %p126 = scmp.eq.s32.totalorder %s23, 0
      %p127 = por %p125, %p126
      %s129 = sadd.s32 %s128, 1
      %p132 = scmp.eq.s32.totalorder %s17, 3
      %p133 = scmp.ne.s32.totalorder %s128, %s130
      %p134 = scmp.eq.s32.totalorder %s17, 0
      %p135 = por %p133, %p134
      %p136 = scmp.ne.s32.totalorder %s128, %s130
      %p137 = scmp.eq.s32.totalorder %s22, 3
      %p138 = por %p136, %p137
      %p139 = scmp.ne.s32.totalorder %s130, %s131
      %p140 = scmp.eq.s32.totalorder %s22, 0
      %p141 = por %p139, %p140
      %p142 = scmp.ne.s32.totalorder %s130, %s131
      %p143 = scmp.eq.s32.totalorder %s23, 3
      %p144 = por %p142, %p143
      %p146 = scmp.ne.s32.totalorder %s131, %s145
      %p147 = scmp.eq.s32.totalorder %s23, 0
      %p148 = por %p146, %p147
      %s149 = ssub.s32 %s24, %s36
      %s150 = ssub.s32 %s25, %s32
      %s151 = sor.u32 %s149, %s150
      %p152 = scmp.eq.s32.totalorder %s151, 0
      %s154 = sadd.s32 %s153, 1
      %s155 = scalar_select %p152, %s153, %s154
      %p158 = pneg %p152
      %p159 = scmp.eq.s32.totalorder %s17, 3
      %p160 = por %p158, %p159
      %p161 = scmp.ne.s32.totalorder %s153, %s156
      %p162 = scmp.eq.s32.totalorder %s17, 0
      %p163 = por %p161, %p162
      %p164 = scmp.ne.s32.totalorder %s153, %s156
      %p165 = scmp.eq.s32.totalorder %s22, 3
      %p166 = por %p164, %p165
      %p167 = scmp.ne.s32.totalorder %s156, %s157
      %p168 = scmp.eq.s32.totalorder %s22, 0
      %p169 = por %p167, %p168
      %p170 = scmp.ne.s32.totalorder %s156, %s157
      %p171 = scmp.eq.s32.totalorder %s23, 3
      %p172 = por %p170, %p171
      %p174 = scmp.ne.s32.totalorder %s157, %s173
      %p175 = scmp.eq.s32.totalorder %s23, 0
      %p176 = por %p174, %p175
      %s177 = ssub.s32 %s24, %s36
      %s178 = ssub.s32 %s25, %s32
      %s179 = sor.u32 %s177, %s178
      %p180 = scmp.eq.s32.totalorder %s179, 0
      %s182 = sadd.s32 %s181, 1
      %s183 = scalar_select %p180, %s181, %s182
      %p186 = pneg %p180
      %p187 = scmp.eq.s32.totalorder %s17, 3
      %p188 = por %p186, %p187
      %p189 = scmp.ne.s32.totalorder %s181, %s184
      %p190 = scmp.eq.s32.totalorder %s17, 0
      %p191 = por %p189, %p190
      %p192 = scmp.ne.s32.totalorder %s181, %s184
      %p193 = scmp.eq.s32.totalorder %s22, 3
      %p194 = por %p192, %p193
      %p195 = scmp.ne.s32.totalorder %s184, %s185
      %p196 = scmp.eq.s32.totalorder %s22, 0
      %p197 = por %p195, %p196
      %p198 = scmp.ne.s32.totalorder %s184, %s185
      %p199 = scmp.eq.s32.totalorder %s23, 3
      %p200 = por %p198, %p199
      %p202 = scmp.ne.s32.totalorder %s185, %s201
      %p203 = scmp.eq.s32.totalorder %s23, 0
      %p204 = por %p202, %p203
      %p205 = scmp.le.s32.totalorder 1, %s17
      %p206 = scmp.lt.s32.totalorder %s17, 5
      %p207 = pnand %p205, %p206
      %p208 = pneg %p207
      // Predicated region
      $region9: #{tpu_custom_call.1} parent=5 // pred_check
        _
      $region10: #{tpu_custom_call.1} parent=5 // pred_check_branch
        %210 = sbr.rel (%p207) target = $region12
      $region11: #{tpu_custom_call.1} parent=5 // pred_region
        %s211 = ssub.s32 %s17, 1
        // Predicated region
        $region13: #{tpu_custom_call.1} parent=11 // pred_check
          %p212 = pneg %p78
        $region14: #{tpu_custom_call.1} parent=11 // pred_check_branch
          %214 = sbr.rel (%p212) target = $region16
        $region15: #{tpu_custom_call.1} parent=11 // pred_region
          %s216 = ssub.s32 256, 256
          %217 = vsyncadd [#allocation5], %s216
          %s218 = sshll.u32 [#allocation4], 4
          %s219 = int_to_ptr.vmem [resolvable:$true] %s218
          %224 = dma.hbm_to_vmem [thread:$0]  %s1, 256, %s219, [#allocation5], 64, 64, 4
        $region16: #{tpu_custom_call.1} parent=11 // pred_fallthru
          _
        // Predicated region
        $region17: #{tpu_custom_call.1} parent=11 // pred_check
          %p225 = pneg %p99
        $region18: #{tpu_custom_call.1} parent=11 // pred_check_branch
          %227 = sbr.rel (%p225) target = $region20
        $region19: #{tpu_custom_call.1} parent=11 // pred_region
          _
        $region20: #{tpu_custom_call.1} parent=11 // pred_fallthru
          _
        // Predicated region
        $region21: #{tpu_custom_call.1} parent=11 // pred_check
          %p228 = pneg %p120
        $region22: #{tpu_custom_call.1} parent=11 // pred_check_branch
          %230 = sbr.rel (%p228) target = $region24
        $region23: #{tpu_custom_call.1} parent=11 // pred_region
          %s232 = ssub.s32 256, 256
          %233 = vsyncadd [#allocation5], %s232
          %s234 = sshll.u32 [#allocation6], 4
          %s235 = int_to_ptr.vmem [resolvable:$true] %s234
          %240 = dma.hbm_to_vmem [thread:$0]  %s3, 256, %s235, [#allocation5], 64, 64, 4
        $region24: #{tpu_custom_call.1} parent=11 // pred_fallthru
          _
        // Predicated region
        $region25: #{tpu_custom_call.1} parent=11 // pred_check
          %p241 = pneg %p141
        $region26: #{tpu_custom_call.1} parent=11 // pred_check_branch
          %243 = sbr.rel (%p241) target = $region28
        $region27: #{tpu_custom_call.1} parent=11 // pred_region
          _
        $region28: #{tpu_custom_call.1} parent=11 // pred_fallthru
          _
      $region12: #{tpu_custom_call.1} parent=5 // pred_fallthru
        _
      %p244 = scmp.lt.s32.totalorder %s17, 4
      // Predicated region
      $region29: #{tpu_custom_call.1} parent=5 // pred_check
        %p245 = pneg %p244
      $region30: #{tpu_custom_call.1} parent=5 // pred_check_branch
        %247 = sbr.rel (%p245) target = $region32
      $region31: #{tpu_custom_call.1} parent=5 // pred_region
        // Predicated region
        $region33: #{tpu_custom_call.1} parent=31 // pred_check
          %p248 = pneg %p51
        $region34: #{tpu_custom_call.1} parent=31 // pred_check_branch
          %250 = sbr.rel (%p248) target = $region36
        $region35: #{tpu_custom_call.1} parent=31 // pred_region
          %s251 = sand.u32 %s41, 1
          %s252 = scalar_lea.sflag [#allocation3], %s251
          %s253 = sand.u32 %s41, 1
          %s254 = smul.addr %s253, 8
          %s255 = scalar_lea.vmem [#allocation2], %s254
          %s257 = ssub.s32 128, 128
          %258 = vsyncadd %s252, %s257
          %s259 = smul.addr %s24, 2
          %s260 = sadd.s32 %s25, %s259
          %s261 = smul.addr %s260, 128
          %s262 = scalar_lea.hbm %s0, %s261
          %s264 = sshll.u32 %s255, 4
          %s265 = int_to_ptr.vmem [resolvable:$true] %s264
          %267 = dma.hbm_to_vmem [thread:$0]  %s262, 128, %s265, %s252
        $region36: #{tpu_custom_call.1} parent=31 // pred_fallthru
          _
      $region32: #{tpu_custom_call.1} parent=5 // pred_fallthru
        _
      %p268 = scmp.le.s32.totalorder 1, %s17
      %p269 = scmp.lt.s32.totalorder %s17, 5
      %p270 = pnand %p268, %p269
      %p271 = pneg %p270
      // Predicated region
      $region37: #{tpu_custom_call.1} parent=5 // pred_check
        _
      $region38: #{tpu_custom_call.1} parent=5 // pred_check_branch
        %273 = sbr.rel (%p270) target = $region40
      $region39: #{tpu_custom_call.1} parent=5 // pred_region
        %s274 = ssub.s32 %s17, 1
        %s275 = sand.u32 %s44, 1
        %s276 = scalar_lea.sflag [#allocation3], %s275
        %s277 = sand.u32 %s44, 1
        %s278 = smul.addr %s277, 8
        %s279 = scalar_lea.vmem [#allocation2], %s278
        // Predicated region
        $region41: #{tpu_custom_call.1} parent=39 // pred_check
          %p280 = pneg %p57
        $region42: #{tpu_custom_call.1} parent=39 // pred_check_branch
          %282 = sbr.rel (%p280) target = $region44
        $region43: #{tpu_custom_call.1} parent=39 // pred_region
          %283 = dma.done %s276, 128
        $region44: #{tpu_custom_call.1} parent=39 // pred_fallthru
          _
        // Predicated region
        $region45: #{tpu_custom_call.1} parent=39 // pred_check
          %p284 = pneg %p78
        $region46: #{tpu_custom_call.1} parent=39 // pred_check_branch
          %286 = sbr.rel (%p284) target = $region48
        $region47: #{tpu_custom_call.1} parent=39 // pred_region
          %287 = dma.done [#allocation5], 256
        $region48: #{tpu_custom_call.1} parent=39 // pred_fallthru
          _
        // Predicated region
        $region49: #{tpu_custom_call.1} parent=39 // pred_check
          %p288 = pneg %p120
        $region50: #{tpu_custom_call.1} parent=39 // pred_check_branch
          %290 = sbr.rel (%p288) target = $region52
        $region51: #{tpu_custom_call.1} parent=39 // pred_region
          %291 = dma.done [#allocation5], 256
        $region52: #{tpu_custom_call.1} parent=39 // pred_fallthru
          _
        %s292 = sand.u32 %s44, 1
        %s293 = scalar_lea.sflag [#allocation3], %s292
        %s294 = sand.u32 %s44, 1
        %s295 = smul.addr %s294, 8
        %s296 = scalar_lea.vmem [#allocation2], %s295
        %p297 = pneg %p57
        %p298 = pneg %p54
        %p299 = pneg %p78
        %p300 = pneg %p75
        %p301 = pneg %p99
        %p302 = pneg %p96
        %p303 = pneg %p120
        %p304 = pneg %p117
        %p305 = pneg %p141
        %p306 = pneg %p138
        %p307 = pneg %p169
        %p308 = pneg %p166
        %s309 = sand.u32 %s156, 1
        %s310 = sand.u32 %s156, 1
        %s311 = smul.addr %s310, 16
        %s312 = scalar_lea.vmem [#allocation7], %s311
        %p313 = pneg %p197
        %p314 = pneg %p194
        %s315 = sand.u32 %s184, 1
        %s316 = sand.u32 %s184, 1
        %s317 = smul.addr %s316, 16
        %s318 = scalar_lea.vmem [#allocation8], %s317
        %v320 = vld [vmem:[%s279] sm:$0xff]
        %v321 = vpack.c.bf16 %v320, %v320
        %v322 = vld [vmem:[#allocation4] sm:$0xf]
        %v323 = vld [vmem:[#allocation4 + $0x4] sm:$0xf]
        %v324 = vld [vmem:[#allocation4 + $0x8] sm:$0xf]
        %v325 = vld [vmem:[#allocation4 + $0xc] sm:$0xf]
        %v326 = vld [vmem:[%s2] sm:$0x1]
        %v328 = vlaneseq
        %v329 = vshrl.u32 %v328, 7
        %v330 = vsub.s32 0, %v329
        %v331 = vrot.slane %v326, %v330
        %v337 = vunpack.c.l.b16 %v322
        %v338 = vunpack.c.l.b16 %v323
        %v339 = vunpack.c.l.b16 %v324
        %v340 = vunpack.c.l.b16 %v325
        %v341 = vpack.c.b16 %v338, %v337
        %v342 = vpack.c.b16 %v340, %v339
        %vm345 = vcmask 261120
        %v347 = vsel %vm345, %v321, 0
        %349 = vmatprep.subr.bf16.mxu0 0
        %350 = vmatpush1.bf16.msra.mxu0 %v341
        %351 = vmatprep.subr.bf16.mxu0 0
        %352 = vmatpush1.bf16.msra.mxu0 %v342
        %353 = vmatprep.subr.bf16.mxu0 0
        %354 = vmatpush1.bf16.msra.mxu0 0
        %355 = vmatprep.subr.bf16.mxu0 0
        %356 = vmatpush1.bf16.msra.mxu0 0
        %357 = vmatprep.subr.bf16.mxu0 0
        %358 = vmatpush1.bf16.msra.mxu0 0
        %359 = vmatprep.subr.bf16.mxu0 0
        %360 = vmatpush1.bf16.msra.mxu0 0
        %361 = vmatprep.subr.bf16.mxu0 0
        %362 = vmatpush1.bf16.msra.mxu0 0
        %363 = vmatprep.subr.bf16.mxu0 0
        %364 = vmatpush1.bf16.msra.mxu0 0
        %365 = vmatprep.subr.bf16.mxu0 0
        %366 = vmatpush1.bf16.msra.mxu0 0
        %367 = vmatprep.subr.bf16.mxu0 0
        %368 = vmatpush1.bf16.msra.mxu0 0
        %369 = vmatprep.subr.bf16.mxu0 0
        %370 = vmatpush1.bf16.msra.mxu0 0
        %371 = vmatprep.subr.bf16.mxu0 0
        %372 = vmatpush1.bf16.msra.mxu0 0
        %373 = vmatprep.subr.bf16.mxu0 0
        %374 = vmatpush1.bf16.msra.mxu0 0
        %375 = vmatprep.subr.bf16.mxu0 0
        %376 = vmatpush1.bf16.msra.mxu0 0
        %377 = vmatprep.subr.bf16.mxu0 0
        %378 = vmatpush1.bf16.msra.mxu0 0
        %379 = vmatprep.subr.bf16.mxu0 0
        %380 = vmatpush1.bf16.msra.mxu0 0
        %381 = vmatprep.mubr.bf16.mxu0 0
        %382 = vmatmul.mubr.bf16.gmra.mrb[0].mxu0 %v347
        %v383 = vpop.f32.mrb[0].mxu0
        %v384 = vadd.f32 %v331, %v383
        %v385 = vpop.f32.mrb[0].mxu0
        %v386 = vpop.f32.mrb[0].mxu0
        %v387 = vpop.f32.mrb[0].mxu0
        %388 = vdwg.mxu0
        %v389 = vld [vmem:[#allocation6] sm:$0xf]
        %v390 = vld [vmem:[#allocation6 + $0x4] sm:$0xf]
        %v391 = vld [vmem:[#allocation6 + $0x8] sm:$0xf]
        %v392 = vld [vmem:[#allocation6 + $0xc] sm:$0xf]
        %v393 = vld [vmem:[%s4] sm:$0x1]
        %v395 = vlaneseq
        %v396 = vshrl.u32 %v395, 7
        %v397 = vsub.s32 0, %v396
        %v398 = vrot.slane %v393, %v397
        %v404 = vunpack.c.l.b16 %v389
        %v405 = vunpack.c.l.b16 %v390
        %v406 = vunpack.c.l.b16 %v391
        %v407 = vunpack.c.l.b16 %v392
        %v408 = vpack.c.b16 %v405, %v404
        %v409 = vpack.c.b16 %v407, %v406
        %412 = vmatprep.subr.bf16.mxu0 0
        %413 = vmatpush1.bf16.msra.mxu0 %v408
        %414 = vmatprep.subr.bf16.mxu0 0
        %415 = vmatpush1.bf16.msra.mxu0 %v409
        %416 = vmatprep.subr.bf16.mxu0 0
        %417 = vmatpush1.bf16.msra.mxu0 0
        %418 = vmatprep.subr.bf16.mxu0 0
        %419 = vmatpush1.bf16.msra.mxu0 0
        %420 = vmatprep.subr.bf16.mxu0 0
        %421 = vmatpush1.bf16.msra.mxu0 0
        %422 = vmatprep.subr.bf16.mxu0 0
        %423 = vmatpush1.bf16.msra.mxu0 0
        %424 = vmatprep.subr.bf16.mxu0 0
        %425 = vmatpush1.bf16.msra.mxu0 0
        %426 = vmatprep.subr.bf16.mxu0 0
        %427 = vmatpush1.bf16.msra.mxu0 0
        %428 = vmatprep.subr.bf16.mxu0 0
        %429 = vmatpush1.bf16.msra.mxu0 0
        %430 = vmatprep.subr.bf16.mxu0 0
        %431 = vmatpush1.bf16.msra.mxu0 0
        %432 = vmatprep.subr.bf16.mxu0 0
        %433 = vmatpush1.bf16.msra.mxu0 0
        %434 = vmatprep.subr.bf16.mxu0 0
        %435 = vmatpush1.bf16.msra.mxu0 0
        %436 = vmatprep.subr.bf16.mxu0 0
        %437 = vmatpush1.bf16.msra.mxu0 0
        %438 = vmatprep.subr.bf16.mxu0 0
        %439 = vmatpush1.bf16.msra.mxu0 0
        %440 = vmatprep.subr.bf16.mxu0 0
        %441 = vmatpush1.bf16.msra.mxu0 0
        %442 = vmatprep.subr.bf16.mxu0 0
        %443 = vmatpush1.bf16.msra.mxu0 0
        %444 = vmatprep.mubr.bf16.mxu0 0
        %445 = vmatmul.mubr.bf16.gmra.mrb[0].mxu0 %v347
        %v446 = vpop.f32.mrb[0].mxu0
        %v447 = vadd.f32 %v398, %v446
        %v448 = vpop.f32.mrb[0].mxu0
        %v449 = vpop.f32.mrb[0].mxu0
        %v450 = vpop.f32.mrb[0].mxu0
        %451 = vdwg.mxu0
        %v452 = vpack.c.bf16 %v384, %v384
        %454 = vrot.lane.b32.xlu0 %v452, 120
        %v455 = vpop.permute.xlu0 %454
        %456 = vrot.lane.b32.xlu0 %v452, 112
        %v457 = vpop.permute.xlu0 %456
        %458 = vrot.lane.b32.xlu0 %v452, 104
        %v459 = vpop.permute.xlu0 %458
        %v461 = vunpack.c.l.s4 1983009808
        %v462 = vunpack.c.0.s8 %v461
        %v463 = vlaneseq
        %v464 = vshrl.u32 %v463, 7
        %v465 = vsub.s32 %v462, %v464
        %v466 = vrot.slane %v452, %v465
        %v469 = vunpack.c.l.s4 1983009808
        %v470 = vunpack.c.0.s8 %v469
        %v471 = vlaneseq
        %v472 = vshrl.u32 %v471, 7
        %v473 = vsub.s32 %v470, %v472
        %v474 = vrot.slane %v457, %v473
        %v475 = vcombine.low %v466, %v474
        %v476 = vcombine.high %v466, %v474
        %v478 = vunpack.c.l.s4 1934713408
        %v479 = vunpack.c.0.s8 %v478
        %v480 = vlaneseq
        %v481 = vshrl.u32 %v480, 7
        %v482 = vsub.s32 %v479, %v481
        %v483 = vrot.slane %v475, %v482
        %v485 = vunpack.c.l.s4 1934713408
        %v486 = vunpack.c.0.s8 %v485
        %v487 = vlaneseq
        %v488 = vshrl.u32 %v487, 7
        %v489 = vsub.s32 %v486, %v488
        %v490 = vrot.slane %v476, %v489
        %v491 = vcombine.high %v483, 0
        %v492 = vcombine.high %v490, 0
        %v495 = vunpack.c.l.s4 1983009808
        %v496 = vunpack.c.0.s8 %v495
        %v497 = vlaneseq
        %v498 = vshrl.u32 %v497, 7
        %v499 = vsub.s32 %v496, %v498
        %v500 = vrot.slane %v455, %v499
        %v503 = vunpack.c.l.s4 1983009808
        %v504 = vunpack.c.0.s8 %v503
        %v505 = vlaneseq
        %v506 = vshrl.u32 %v505, 7
        %v507 = vsub.s32 %v504, %v506
        %v508 = vrot.slane %v459, %v507
        %v509 = vcombine.low %v500, %v508
        %v510 = vcombine.high %v500, %v508
        %v512 = vunpack.c.l.s4 1934713408
        %v513 = vunpack.c.0.s8 %v512
        %v514 = vlaneseq
        %v515 = vshrl.u32 %v514, 7
        %v516 = vsub.s32 %v513, %v515
        %v517 = vrot.slane %v509, %v516
        %v519 = vunpack.c.l.s4 1934713408
        %v520 = vunpack.c.0.s8 %v519
        %v521 = vlaneseq
        %v522 = vshrl.u32 %v521, 7
        %v523 = vsub.s32 %v520, %v522
        %v524 = vrot.slane %v510, %v523
        %v525 = vcombine.high %v517, 0
        %v526 = vcombine.high %v524, 0
        %v529 = vpack.i.b16 %v517, %v483
        %v531 = vshrl.u32 %v483, 16
        %v532 = vshrl.u32 %v517, 16
        %v533 = vpack.i.b16 %v532, %v531
        %v537 = vpack.i.b16 %v525, %v491
        %v539 = vshrl.u32 %v491, 16
        %v540 = vshrl.u32 %v525, 16
        %v541 = vpack.i.b16 %v540, %v539
        %v545 = vpack.i.b16 %v524, %v490
        %v547 = vshrl.u32 %v490, 16
        %v548 = vshrl.u32 %v524, 16
        %v549 = vpack.i.b16 %v548, %v547
        %v553 = vpack.i.b16 %v526, %v492
        %v555 = vshrl.u32 %v492, 16
        %v556 = vshrl.u32 %v526, 16
        %v557 = vpack.i.b16 %v556, %v555
        %v559 = vcombine.low %v529, %v545
        %v561 = vunpack.c.l.s4 1983009808
        %v562 = vunpack.c.0.s8 %v561
        %v563 = vlaneseq
        %v564 = vshrl.u32 %v563, 7
        %v565 = vsub.s32 %v562, %v564
        %v566 = vrot.slane %v559, %v565
        %v567 = vcombine.low %v537, %v553
        %v569 = vunpack.c.l.s4 1983009808
        %v570 = vunpack.c.0.s8 %v569
        %v571 = vlaneseq
        %v572 = vshrl.u32 %v571, 7
        %v573 = vsub.s32 %v570, %v572
        %v574 = vrot.slane %v567, %v573
        %v575 = vcombine.low %v566, %v574
        %v577 = vunpack.c.l.s4 1934713408
        %v578 = vunpack.c.0.s8 %v577
        %v579 = vlaneseq
        %v580 = vshrl.u32 %v579, 7
        %v581 = vsub.s32 %v578, %v580
        %v582 = vrot.slane %v575, %v581
        %v583 = vcombine.high %v582, 0
        %v584 = vcombine.low %v533, %v549
        %v586 = vunpack.c.l.s4 1983009808
        %v587 = vunpack.c.0.s8 %v586
        %v588 = vlaneseq
        %v589 = vshrl.u32 %v588, 7
        %v590 = vsub.s32 %v587, %v589
        %v591 = vrot.slane %v584, %v590
        %v592 = vcombine.low %v541, %v557
        %v594 = vunpack.c.l.s4 1983009808
        %v595 = vunpack.c.0.s8 %v594
        %v596 = vlaneseq
        %v597 = vshrl.u32 %v596, 7
        %v598 = vsub.s32 %v595, %v597
        %v599 = vrot.slane %v592, %v598
        %v600 = vcombine.low %v591, %v599
        %v602 = vunpack.c.l.s4 1934713408
        %v603 = vunpack.c.0.s8 %v602
        %v604 = vlaneseq
        %v605 = vshrl.u32 %v604, 7
        %v606 = vsub.s32 %v603, %v605
        %v607 = vrot.slane %v600, %v606
        %v608 = vcombine.high %v607, 0
        %v611 = vpack.i.b16 %v607, %v582
        %v613 = vshrl.u32 %v582, 16
        %v614 = vshrl.u32 %v607, 16
        %v615 = vpack.i.b16 %v614, %v613
        %v619 = vpack.i.b16 %v608, %v583
        %v621 = vshrl.u32 %v583, 16
        %v622 = vshrl.u32 %v608, 16
        %v623 = vpack.i.b16 %v622, %v621
        %v625 = vpack.c.bf16 %v447, %v447
        %627 = vrot.lane.b32.xlu0 %v625, 120
        %v628 = vpop.permute.xlu0 %627
        %629 = vrot.lane.b32.xlu0 %v625, 112
        %v630 = vpop.permute.xlu0 %629
        %631 = vrot.lane.b32.xlu0 %v625, 104
        %v632 = vpop.permute.xlu0 %631
        %v634 = vunpack.c.l.s4 1983009808
        %v635 = vunpack.c.0.s8 %v634
        %v636 = vlaneseq
        %v637 = vshrl.u32 %v636, 7
        %v638 = vsub.s32 %v635, %v637
        %v639 = vrot.slane %v625, %v638
        %v642 = vunpack.c.l.s4 1983009808
        %v643 = vunpack.c.0.s8 %v642
        %v644 = vlaneseq
        %v645 = vshrl.u32 %v644, 7
        %v646 = vsub.s32 %v643, %v645
        %v647 = vrot.slane %v630, %v646
        %v648 = vcombine.low %v639, %v647
        %v649 = vcombine.high %v639, %v647
        %v651 = vunpack.c.l.s4 1934713408
        %v652 = vunpack.c.0.s8 %v651
        %v653 = vlaneseq
        %v654 = vshrl.u32 %v653, 7
        %v655 = vsub.s32 %v652, %v654
        %v656 = vrot.slane %v648, %v655
        %v658 = vunpack.c.l.s4 1934713408
        %v659 = vunpack.c.0.s8 %v658
        %v660 = vlaneseq
        %v661 = vshrl.u32 %v660, 7
        %v662 = vsub.s32 %v659, %v661
        %v663 = vrot.slane %v649, %v662
        %v664 = vcombine.high %v656, 0
        %v665 = vcombine.high %v663, 0
        %v668 = vunpack.c.l.s4 1983009808
        %v669 = vunpack.c.0.s8 %v668
        %v670 = vlaneseq
        %v671 = vshrl.u32 %v670, 7
        %v672 = vsub.s32 %v669, %v671
        %v673 = vrot.slane %v628, %v672
        %v676 = vunpack.c.l.s4 1983009808
        %v677 = vunpack.c.0.s8 %v676
        %v678 = vlaneseq
        %v679 = vshrl.u32 %v678, 7
        %v680 = vsub.s32 %v677, %v679
        %v681 = vrot.slane %v632, %v680
        %v682 = vcombine.low %v673, %v681
        %v683 = vcombine.high %v673, %v681
        %v685 = vunpack.c.l.s4 1934713408
        %v686 = vunpack.c.0.s8 %v685
        %v687 = vlaneseq
        %v688 = vshrl.u32 %v687, 7
        %v689 = vsub.s32 %v686, %v688
        %v690 = vrot.slane %v682, %v689
        %v692 = vunpack.c.l.s4 1934713408
        %v693 = vunpack.c.0.s8 %v692
        %v694 = vlaneseq
        %v695 = vshrl.u32 %v694, 7
        %v696 = vsub.s32 %v693, %v695
        %v697 = vrot.slane %v683, %v696
        %v698 = vcombine.high %v690, 0
        %v699 = vcombine.high %v697, 0
        %v702 = vpack.i.b16 %v690, %v656
        %v704 = vshrl.u32 %v656, 16
        %v705 = vshrl.u32 %v690, 16
        %v706 = vpack.i.b16 %v705, %v704
        %v710 = vpack.i.b16 %v698, %v664
        %v712 = vshrl.u32 %v664, 16
        %v713 = vshrl.u32 %v698, 16
        %v714 = vpack.i.b16 %v713, %v712
        %v718 = vpack.i.b16 %v697, %v663
        %v720 = vshrl.u32 %v663, 16
        %v721 = vshrl.u32 %v697, 16
        %v722 = vpack.i.b16 %v721, %v720
        %v726 = vpack.i.b16 %v699, %v665
        %v728 = vshrl.u32 %v665, 16
        %v729 = vshrl.u32 %v699, 16
        %v730 = vpack.i.b16 %v729, %v728
        %v732 = vcombine.low %v702, %v718
        %v734 = vunpack.c.l.s4 1983009808
        %v735 = vunpack.c.0.s8 %v734
        %v736 = vlaneseq
        %v737 = vshrl.u32 %v736, 7
        %v738 = vsub.s32 %v735, %v737
        %v739 = vrot.slane %v732, %v738
        %v740 = vcombine.low %v710, %v726
        %v742 = vunpack.c.l.s4 1983009808
        %v743 = vunpack.c.0.s8 %v742
        %v744 = vlaneseq
        %v745 = vshrl.u32 %v744, 7
        %v746 = vsub.s32 %v743, %v745
        %v747 = vrot.slane %v740, %v746
        %v748 = vcombine.low %v739, %v747
        %v750 = vunpack.c.l.s4 1934713408
        %v751 = vunpack.c.0.s8 %v750
        %v752 = vlaneseq
        %v753 = vshrl.u32 %v752, 7
        %v754 = vsub.s32 %v751, %v753
        %v755 = vrot.slane %v748, %v754
        %v756 = vcombine.high %v755, 0
        %v757 = vcombine.low %v706, %v722
        %v759 = vunpack.c.l.s4 1983009808
        %v760 = vunpack.c.0.s8 %v759
        %v761 = vlaneseq
        %v762 = vshrl.u32 %v761, 7
        %v763 = vsub.s32 %v760, %v762
        %v764 = vrot.slane %v757, %v763
        %v765 = vcombine.low %v714, %v730
        %v767 = vunpack.c.l.s4 1983009808
        %v768 = vunpack.c.0.s8 %v767
        %v769 = vlaneseq
        %v770 = vshrl.u32 %v769, 7
        %v771 = vsub.s32 %v768, %v770
        %v772 = vrot.slane %v765, %v771
        %v773 = vcombine.low %v764, %v772
        %v775 = vunpack.c.l.s4 1934713408
        %v776 = vunpack.c.0.s8 %v775
        %v777 = vlaneseq
        %v778 = vshrl.u32 %v777, 7
        %v779 = vsub.s32 %v776, %v778
        %v780 = vrot.slane %v773, %v779
        %v781 = vcombine.high %v780, 0
        %v784 = vpack.i.b16 %v780, %v755
        %v786 = vshrl.u32 %v755, 16
        %v787 = vshrl.u32 %v780, 16
        %v788 = vpack.i.b16 %v787, %v786
        %v792 = vpack.i.b16 %v781, %v756
        %v794 = vshrl.u32 %v756, 16
        %v795 = vshrl.u32 %v781, 16
        %v796 = vpack.i.b16 %v795, %v794
        %vm798 = vcmask 60416
        %799 = vst.msk [vmem:[%s312] sm:$0xf] %vm798, %v611
        %800 = vst.msk [vmem:[%s312 + $0x4] sm:$0xf] %vm798, %v615
        %801 = vst.msk [vmem:[%s312 + $0x8] sm:$0xf] %vm798, %v619
        %802 = vst.msk [vmem:[%s312 + $0xc] sm:$0xf] %vm798, %v623
        %803 = vst.msk [vmem:[%s318] sm:$0xf] %vm798, %v784
        %804 = vst.msk [vmem:[%s318 + $0x4] sm:$0xf] %vm798, %v788
        %805 = vst.msk [vmem:[%s318 + $0x8] sm:$0xf] %vm798, %v792
        %806 = vst.msk [vmem:[%s318 + $0xc] sm:$0xf] %vm798, %v796
        %s807 = sand.u32 %s156, 1
        %s808 = sand.u32 %s156, 1
        %s809 = smul.addr %s808, 16
        %s810 = scalar_lea.vmem [#allocation7], %s809
        %s811 = sand.u32 %s184, 1
        %s812 = sand.u32 %s184, 1
        %s813 = smul.addr %s812, 16
        %s814 = scalar_lea.vmem [#allocation8], %s813
        // Predicated region
        $region53: #{tpu_custom_call.1} parent=39 // pred_check
          %p815 = pneg %p166
        $region54: #{tpu_custom_call.1} parent=39 // pred_check_branch
          %817 = sbr.rel (%p815) target = $region56
        $region55: #{tpu_custom_call.1} parent=39 // pred_region
          %s818 = smul.addr %s26, 8
          %s819 = sadd.s32 %s27, %s818
          %s820 = smul.addr %s819, 4
          %s821 = scalar_lea.vmem %s5, %s820
          // Predicated region
          $region57: #{tpu_custom_call.1} parent=55 // pred_check
            _
          $region58: #{tpu_custom_call.1} parent=55 // pred_check_branch
            %823 = sbr.rel (0) target = $region60
          $region59: #{tpu_custom_call.1} parent=55 // pred_region
            // Predicated region
            $region61: #{tpu_custom_call.1} parent=59 // pred_check
              _
            $region62: #{tpu_custom_call.1} parent=59 // pred_check_branch
              %825 = sbr.rel target = $region64
            $region63: #{tpu_custom_call.1} parent=59 // pred_region
              // Predicated region
              $region76: #{tpu_custom_call.1} parent=63 // pred_check
                _
              $region77: #{tpu_custom_call.1} parent=63 // pred_check_branch
                %846 = sbr.rel (0) target = $region79
              $region78: #{tpu_custom_call.1} parent=63 // pred_region
                loop: start=0, step=1, limit=1
                $region80: #{tpu_custom_call.1} parent=78 // loop_pre_header
                  _
                $region81: #{tpu_custom_call.1} parent=78 // loop_header
                  %s848 = sphi 0, %s852
                  %p849 = scmp.ge.s32.totalorder %s848, 1
                  %s853 = sphi %s810, %s810
                  %s854 = sphi %s821, %s821
                $region82: #{tpu_custom_call.1} parent=78 // loop_header_branch
                  %851 = sbr.rel (%p849) target = $region86
                $region83: #{tpu_custom_call.1} parent=78 // loop_body
                  _
                $region84: #{tpu_custom_call.1} parent=78 // loop_footer
                  %s852 = sadd.s32 1, %s848
                $region85: #{tpu_custom_call.1} parent=78 // loop_footer_branch
                  %847 = sbr.rel target = $region81
                $region86: #{tpu_custom_call.1} parent=78 // loop_exit
                  _
                loop: start=0, step=1, limit=1
                $region87: #{tpu_custom_call.1} parent=78 // loop_pre_header
                  _
                $region88: #{tpu_custom_call.1} parent=78 // loop_header
                  %s857 = sphi 0, %s861
                  %p858 = scmp.ge.s32.totalorder %s857, 1
                  %s862 = sphi %s810, %s810
                  %s863 = sphi %s821, %s821
                $region89: #{tpu_custom_call.1} parent=78 // loop_header_branch
                  %860 = sbr.rel (%p858) target = $region93
                $region90: #{tpu_custom_call.1} parent=78 // loop_body
                  %v864 = vld [vmem:[%s862] sm:$0xf]
                  %865 = vst [vmem:[%s863] sm:$0xf] %v864
                  %v866 = vld [vmem:[%s862 + $0x4] sm:$0xf]
                  %867 = vst [vmem:[%s863 + $0x8] sm:$0xf] %v866
                  %v868 = vld [vmem:[%s862 + $0x8] sm:$0xf]
                  %869 = vst [vmem:[%s863 + $0x10] sm:$0xf] %v868
                  %v870 = vld [vmem:[%s862 + $0xc] sm:$0xf]
                  %871 = vst [vmem:[%s863 + $0x18] sm:$0xf] %v870
                $region91: #{tpu_custom_call.1} parent=78 // loop_footer
                  %s861 = sadd.s32 1, %s857
                $region92: #{tpu_custom_call.1} parent=78 // loop_footer_branch
                  %856 = sbr.rel target = $region88
                $region93: #{tpu_custom_call.1} parent=78 // loop_exit
                  _
              $region79: #{tpu_custom_call.1} parent=63 // pred_fallthru
                _
            $region64: #{tpu_custom_call.1} parent=59 // pred_fallthru
              _
            // Predicated region
            $region65: #{tpu_custom_call.1} parent=59 // pred_check
              _
            $region66: #{tpu_custom_call.1} parent=59 // pred_check_branch
              %827 = sbr.rel (0) target = $region68
            $region67: #{tpu_custom_call.1} parent=59 // pred_region
              loop: start=0, step=1, limit=1
              $region69: #{tpu_custom_call.1} parent=67 // loop_pre_header
                _
              $region70: #{tpu_custom_call.1} parent=67 // loop_header
                %s830 = sphi 0, %s834
                %p831 = scmp.ge.s32.totalorder %s830, 1
                %s835 = sphi %s810, %s810
                %s836 = sphi %s821, %s821
              $region71: #{tpu_custom_call.1} parent=67 // loop_header_branch
                %833 = sbr.rel (%p831) target = $region75
              $region72: #{tpu_custom_call.1} parent=67 // loop_body
                %v837 = vld [vmem:[%s835] sm:$0xf]
                %838 = vst [vmem:[%s836] sm:$0xf] %v837
                %v839 = vld [vmem:[%s835 + $0x4] sm:$0xf]
                %840 = vst [vmem:[%s836 + $0x8] sm:$0xf] %v839
                %v841 = vld [vmem:[%s835 + $0x8] sm:$0xf]
                %842 = vst [vmem:[%s836 + $0x10] sm:$0xf] %v841
                %v843 = vld [vmem:[%s835 + $0xc] sm:$0xf]
                %844 = vst [vmem:[%s836 + $0x18] sm:$0xf] %v843
              $region73: #{tpu_custom_call.1} parent=67 // loop_footer
                %s834 = sadd.s32 1, %s830
              $region74: #{tpu_custom_call.1} parent=67 // loop_footer_branch
                %829 = sbr.rel target = $region70
              $region75: #{tpu_custom_call.1} parent=67 // loop_exit
                _
            $region68: #{tpu_custom_call.1} parent=59 // pred_fallthru
              _
          $region60: #{tpu_custom_call.1} parent=55 // pred_fallthru
            _
          %872 = vnop
        $region56: #{tpu_custom_call.1} parent=39 // pred_fallthru
          _
        // Predicated region
        $region94: #{tpu_custom_call.1} parent=39 // pred_check
          %p873 = pneg %p194
        $region95: #{tpu_custom_call.1} parent=39 // pred_check_branch
          %875 = sbr.rel (%p873) target = $region97
        $region96: #{tpu_custom_call.1} parent=39 // pred_region
          %s876 = smul.addr %s26, 8
          %s877 = sadd.s32 %s27, %s876
          %s878 = smul.addr %s877, 4
          %s879 = scalar_lea.vmem %s6, %s878
          // Predicated region
          $region98: #{tpu_custom_call.1} parent=96 // pred_check
            _
          $region99: #{tpu_custom_call.1} parent=96 // pred_check_branch
            %881 = sbr.rel (0) target = $region101
          $region100: #{tpu_custom_call.1} parent=96 // pred_region
            // Predicated region
            $region102: #{tpu_custom_call.1} parent=100 // pred_check
              _
            $region103: #{tpu_custom_call.1} parent=100 // pred_check_branch
              %883 = sbr.rel target = $region105
            $region104: #{tpu_custom_call.1} parent=100 // pred_region
              // Predicated region
              $region117: #{tpu_custom_call.1} parent=104 // pred_check
                _
              $region118: #{tpu_custom_call.1} parent=104 // pred_check_branch
                %904 = sbr.rel (0) target = $region120
              $region119: #{tpu_custom_call.1} parent=104 // pred_region
                loop: start=0, step=1, limit=1
                $region121: #{tpu_custom_call.1} parent=119 // loop_pre_header
                  _
                $region122: #{tpu_custom_call.1} parent=119 // loop_header
                  %s906 = sphi 0, %s910
                  %p907 = scmp.ge.s32.totalorder %s906, 1
                  %s911 = sphi %s814, %s814
                  %s912 = sphi %s879, %s879
                $region123: #{tpu_custom_call.1} parent=119 // loop_header_branch
                  %909 = sbr.rel (%p907) target = $region127
                $region124: #{tpu_custom_call.1} parent=119 // loop_body
                  _
                $region125: #{tpu_custom_call.1} parent=119 // loop_footer
                  %s910 = sadd.s32 1, %s906
                $region126: #{tpu_custom_call.1} parent=119 // loop_footer_branch
                  %905 = sbr.rel target = $region122
                $region127: #{tpu_custom_call.1} parent=119 // loop_exit
                  _
                loop: start=0, step=1, limit=1
                $region128: #{tpu_custom_call.1} parent=119 // loop_pre_header
                  _
                $region129: #{tpu_custom_call.1} parent=119 // loop_header
                  %s915 = sphi 0, %s919
                  %p916 = scmp.ge.s32.totalorder %s915, 1
                  %s920 = sphi %s814, %s814
                  %s921 = sphi %s879, %s879
                $region130: #{tpu_custom_call.1} parent=119 // loop_header_branch
                  %918 = sbr.rel (%p916) target = $region134
                $region131: #{tpu_custom_call.1} parent=119 // loop_body
                  %v922 = vld [vmem:[%s920] sm:$0xf]
                  %923 = vst [vmem:[%s921] sm:$0xf] %v922
                  %v924 = vld [vmem:[%s920 + $0x4] sm:$0xf]
                  %925 = vst [vmem:[%s921 + $0x8] sm:$0xf] %v924
                  %v926 = vld [vmem:[%s920 + $0x8] sm:$0xf]
                  %927 = vst [vmem:[%s921 + $0x10] sm:$0xf] %v926
                  %v928 = vld [vmem:[%s920 + $0xc] sm:$0xf]
                  %929 = vst [vmem:[%s921 + $0x18] sm:$0xf] %v928
                $region132: #{tpu_custom_call.1} parent=119 // loop_footer
                  %s919 = sadd.s32 1, %s915
                $region133: #{tpu_custom_call.1} parent=119 // loop_footer_branch
                  %914 = sbr.rel target = $region129
                $region134: #{tpu_custom_call.1} parent=119 // loop_exit
                  _
              $region120: #{tpu_custom_call.1} parent=104 // pred_fallthru
                _
            $region105: #{tpu_custom_call.1} parent=100 // pred_fallthru
              _
            // Predicated region
            $region106: #{tpu_custom_call.1} parent=100 // pred_check
              _
            $region107: #{tpu_custom_call.1} parent=100 // pred_check_branch
              %885 = sbr.rel (0) target = $region109
            $region108: #{tpu_custom_call.1} parent=100 // pred_region
              loop: start=0, step=1, limit=1
              $region110: #{tpu_custom_call.1} parent=108 // loop_pre_header
                _
              $region111: #{tpu_custom_call.1} parent=108 // loop_header
                %s888 = sphi 0, %s892
                %p889 = scmp.ge.s32.totalorder %s888, 1
                %s893 = sphi %s814, %s814
                %s894 = sphi %s879, %s879
              $region112: #{tpu_custom_call.1} parent=108 // loop_header_branch
                %891 = sbr.rel (%p889) target = $region116
              $region113: #{tpu_custom_call.1} parent=108 // loop_body
                %v895 = vld [vmem:[%s893] sm:$0xf]
                %896 = vst [vmem:[%s894] sm:$0xf] %v895
                %v897 = vld [vmem:[%s893 + $0x4] sm:$0xf]
                %898 = vst [vmem:[%s894 + $0x8] sm:$0xf] %v897
                %v899 = vld [vmem:[%s893 + $0x8] sm:$0xf]
                %900 = vst [vmem:[%s894 + $0x10] sm:$0xf] %v899
                %v901 = vld [vmem:[%s893 + $0xc] sm:$0xf]
                %902 = vst [vmem:[%s894 + $0x18] sm:$0xf] %v901
              $region114: #{tpu_custom_call.1} parent=108 // loop_footer
                %s892 = sadd.s32 1, %s888
              $region115: #{tpu_custom_call.1} parent=108 // loop_footer_branch
                %887 = sbr.rel target = $region111
              $region116: #{tpu_custom_call.1} parent=108 // loop_exit
                _
            $region109: #{tpu_custom_call.1} parent=100 // pred_fallthru
              _
          $region101: #{tpu_custom_call.1} parent=96 // pred_fallthru
            _
          %930 = vnop
        $region97: #{tpu_custom_call.1} parent=39 // pred_fallthru
          _
      $region40: #{tpu_custom_call.1} parent=5 // pred_fallthru
        _
      %p931 = scmp.le.s32.totalorder 2, %s17
      // Predicated region
      $region135: #{tpu_custom_call.1} parent=5 // pred_check
        %p932 = pneg %p931
      $region136: #{tpu_custom_call.1} parent=5 // pred_check_branch
        %934 = sbr.rel (%p932) target = $region138
      $region137: #{tpu_custom_call.1} parent=5 // pred_region
        %s935 = ssub.s32 %s17, 2
        // Predicated region
        $region139: #{tpu_custom_call.1} parent=137 // pred_check
          %p936 = pneg %p172
        $region140: #{tpu_custom_call.1} parent=137 // pred_check_branch
          %938 = sbr.rel (%p936) target = $region142
        $region141: #{tpu_custom_call.1} parent=137 // pred_region
          %s939 = sand.u32 %s157, 1
          %s940 = sand.u32 %s157, 1
          %s941 = smul.addr %s940, 16
          %s942 = scalar_lea.vmem [#allocation7], %s941
        $region142: #{tpu_custom_call.1} parent=137 // pred_fallthru
          _
        // Predicated region
        $region143: #{tpu_custom_call.1} parent=137 // pred_check
          %p943 = pneg %p200
        $region144: #{tpu_custom_call.1} parent=137 // pred_check_branch
          %945 = sbr.rel (%p943) target = $region146
        $region145: #{tpu_custom_call.1} parent=137 // pred_region
          %s946 = sand.u32 %s185, 1
          %s947 = sand.u32 %s185, 1
          %s948 = smul.addr %s947, 16
          %s949 = scalar_lea.vmem [#allocation8], %s948
        $region146: #{tpu_custom_call.1} parent=137 // pred_fallthru
          _
      $region138: #{tpu_custom_call.1} parent=5 // pred_fallthru
        _
    $region6: #{tpu_custom_call.1} parent=1 // loop_footer
      %s21 = sadd.s32 1, %s17
    $region7: #{tpu_custom_call.1} parent=1 // loop_footer_branch
      %16 = sbr.rel target = $region3
    $region8: #{tpu_custom_call.1} parent=1 // loop_exit
      _
    %950 = vsyncpa [#allocation3], 1
    %s951 = scalar_lea.sflag [#allocation3], 1
    %952 = vsyncpa %s951, 1
    %953 = vsyncpa [#allocation5], 1

</llo_original>
